<compile_context>
chip_gen: v7x
topology: tpu7x:2x2x1
jax: 0.10.0
libtpu: 0.0.40
codegen_flags: <defaults>
</compile_context>

<pallas_src>
import numpy as np
import jax
import jax.numpy as jnp
from jax import lax
from jax.experimental import pallas as pl
from jax.experimental.pallas import tpu as pltpu

WINDOW_SIZE = 512
HOP_SIZE = 128
SAMPLE_RATE = 16000
ALPHA = 1e-6
N_THR_COLS = 384          # 257 thresholds padded to 3 * 128 lanes


# ----------------------------------------------------------------------------
# Psychoacoustic masker reference path (host-side NumPy, mirrors PyTorch code)
# ----------------------------------------------------------------------------
def _hann_window(window_size):
    n = np.arange(window_size)
    return 0.5 - 0.5 * np.cos(2.0 * np.pi * n / window_size)  # periodic Hann


def _masker_constants(window_size, sample_rate):
    n_freq = window_size // 2 + 1
    freqs = np.linspace(0.0, sample_rate / 2.0, n_freq)
    bark = 13.0 * np.arctan(0.00076 * freqs) + 3.5 * np.arctan((freqs / 7500.0) ** 2)
    ath = np.full(n_freq, -np.inf)
    valid = (freqs >= 20.0) & (freqs <= 20000.0)
    fk = freqs[valid] * 0.001
    ath[valid] = (3.64 * fk ** -0.8
                  - 6.5 * np.exp(-0.6 * (fk - 3.3) ** 2)
                  + 0.001 * fk ** 4 - 12.0)
    return freqs, bark, ath


def _power_spectral_density(audio, window_size, hop_size):
    n_frames = 1 + (audio.shape[-1] - window_size) // hop_size
    win = _hann_window(window_size)
    idx = np.arange(n_frames)[:, None] * hop_size + np.arange(window_size)[None, :]
    frames = audio[idx] * win                               # (T, W)
    stft = np.fft.rfft(frames, axis=-1).T                   # (F, T)
    gain = np.sqrt(8.0 / 3.0)
    with np.errstate(divide="ignore"):
        psd = 20.0 * np.log10(np.abs(gain * stft / window_size))
    psd = np.maximum(psd, -200.0)
    psd_max = psd.max()
    return 96.0 - psd_max + psd, psd_max


def _find_maskers(psd_vec):
    left = psd_vec[1:-1] - psd_vec[:-2]
    right = psd_vec[1:-1] - psd_vec[2:]
    ind = np.pad((left > 0) & (right > 0), (1, 1))
    masker_idx = np.nonzero(ind)[0]
    if masker_idx.size == 0:
        return np.zeros((0,)), masker_idx
    maskers = 10.0 * np.log10(
        sum(10.0 ** (psd_vec[masker_idx + i] / 10.0) for i in (-1, 0, 1)))
    return maskers, masker_idx


def _filter_maskers(maskers, masker_idx, bark, ath):
    cond = maskers > ath[masker_idx]
    maskers, masker_idx = maskers[cond], masker_idx[cond]
    keep = np.ones(masker_idx.shape, dtype=bool)
    i_prev = 0
    for i in range(1, len(masker_idx)):
        # NOTE: bark indexed by masker-list position, exactly as in the
        # reference PyTorch implementation.
        if bark[i] - bark[i_prev] < 0.5:
            if maskers[i_prev] < maskers[i]:
                i_todelete, i_prev = i_prev, i_prev + 1
            else:
                i_todelete = i
            keep[i_todelete] = False
        else:
            i_prev = i
    return maskers[keep], masker_idx[keep]


def _individual_threshold(maskers, masker_idx, bark):
    delta_shift = -6.025 - 0.275 * bark
    thr = np.zeros((len(masker_idx), bark.shape[0]))
    for k, (j, m) in enumerate(zip(masker_idx, maskers)):
        dz = bark - bark[j]
        spread = 27.0 * dz
        pos = dz > 0
        spread[pos] = (-27.0 + 0.37 * max(m - 40.0, 0.0)) * dz[pos]
        thr[k, :] = m + delta_shift[j] + spread
    return thr


def _global_threshold(indiv, ath):
    with np.errstate(divide="ignore"):
        return 10.0 * np.log10(np.sum(10.0 ** (indiv / 10.0), axis=0)
                               + 10.0 ** (ath / 10.0))


def _threshold_and_psd_max(audio_padded, window_size, hop_size, sample_rate):
    _, bark, ath = _masker_constants(window_size, sample_rate)
    psd, psd_max = _power_spectral_density(audio_padded, window_size, hop_size)
    thr = np.zeros_like(psd)                                 # (F, T)
    for t in range(psd.shape[-1]):
        m, mi = _filter_maskers(*_find_maskers(psd[:, t]), bark, ath)
        thr[:, t] = _global_threshold(_individual_threshold(m, mi, bark), ath)
    return thr, psd_max


# ----------------------------------------------------------------------------
# Fused Hann-windowed real-DFT basis: (W, 512)
#   cols 0..255  : cos bins 0..255
#   col  256     : cos Nyquist bin (its sin column is identically zero)
#   cols 257..511: sin bins 1..255 (sin bin 0 is identically zero)
# ----------------------------------------------------------------------------
def _fused_dft_basis(window_size):
    W = window_size
    F = W // 2 + 1                                           # 257
    n = np.arange(W, dtype=np.float64)[:, None]
    win = _hann_window(W)[:, None]
    basis = np.zeros((W, W), dtype=np.float64)               # (512, 512)
    k_cos = np.arange(F, dtype=np.float64)[None, :]
    basis[:, :F] = win * np.cos(2.0 * np.pi * n * k_cos / W)
    k_sin = np.arange(1, F - 1, dtype=np.float64)[None, :]
    basis[:, F:] = win * np.sin(2.0 * np.pi * n * k_sin / W)
    return basis.astype(np.float32)


# ----------------------------------------------------------------------------
# Pallas kernel: fused STFT + hinge over a flat M-tile of frames.
# Emits per-row hinge sums broadcast across a lane-dense (tile_t, 128) block.
# ----------------------------------------------------------------------------
def _hinge_kernel(frames_ref, basis_ref, thresh_ref, out_ref):
    x = frames_ref[...]                                        # (TT, 512) bf16
    spec = jnp.dot(x, basis_ref[...],
                   preferred_element_type=jnp.float32)         # (TT, 512) f32
    sq = spec * spec
    lo = sq[:, :256]                     # re^2 for bins 0..255
    hi = sq[:, 256:512]                  # [re_256^2, im_1^2, ..., im_255^2]

    # psd bins 0..255 = re^2 + im^2 (im_0 == 0; mask out the Nyquist re^2 at
    # lane 0 of `hi`, it is handled separately below).
    lane = lax.broadcasted_iota(jnp.int32, hi.shape, 1)
    psd_main = lo + jnp.where(lane > 0, hi, 0.0)               # (TT, 256)

    thr = thresh_ref[...].astype(jnp.float32)                  # (TT, 384) bf16->f32
    h_main = jnp.maximum(psd_main - thr[:, :256], 0.0)         # bins 0..255
    # Column 0 of this slice is the Nyquist bin (re_256^2 vs t_256); the
    # remaining columns have +inf thresholds and contribute exactly zero.
    h_tail = jnp.maximum(sq[:, 256:384] - thr[:, 256:384], 0.0)

    row_sum = (jnp.sum(h_main, axis=1, keepdims=True)
               + jnp.sum(h_tail, axis=1, keepdims=True))       # (TT, 1)
    out_ref[...] = jnp.broadcast_to(row_sum, out_ref.shape)


def _masking_hinge_row_sums(frames2d, basis, thresh2d, tile_t):
    rows, W = frames2d.shape
    n_tiles = rows // tile_t
    return pl.pallas_call(
        _hinge_kernel,
        out_shape=jax.ShapeDtypeStruct((rows, 128), jnp.float32),
        grid=(n_tiles,),
        in_specs=[
            pl.BlockSpec((tile_t, W), lambda t: (t, 0)),            # frames (bf16)
            pl.BlockSpec((W, W), lambda t: (0, 0)),                 # DFT basis
            pl.BlockSpec((tile_t, N_THR_COLS), lambda t: (t, 0)),   # thresholds (bf16)
        ],
        out_specs=pl.BlockSpec((tile_t, 128), lambda t: (t, 0)),
        compiler_params=pltpu.CompilerParams(
            dimension_semantics=("parallel",)),
    )(frames2d, basis, thresh2d)


# ----------------------------------------------------------------------------
# Wrapper: FrequencyMaskingLoss.forward (alpha=1e-6, pad=True, normalize=None)
# ----------------------------------------------------------------------------
def frequency_masking_loss(x_adv, x_ref, alpha=ALPHA, window_size=WINDOW_SIZE,
                           hop_size=HOP_SIZE, sample_rate=SAMPLE_RATE):
    B, L = x_adv.shape
    W, H = window_size, hop_size
    F = W // 2 + 1
    pad_len = (W // H - 1) * H

    # normalize=None -> self.peak is never used; skipped (no-op on the output).

    # --- reference path: stabilized masking thresholds & PSD maxima ---------
    # TODO(synk): masker detection/filtering is data-dependent (nonzero +
    # sequential bark-distance pruning); no clean Pallas equivalent, kept on host.
    x_ref_np = np.asarray(x_ref, dtype=np.float64)
    x_ref_pad = np.pad(x_ref_np, ((0, 0), (pad_len, pad_len)))
    thr_list, pm_list = [], []
    for b in range(B):
        thr, pm = _threshold_and_psd_max(x_ref_pad[b], W, H, sample_rate)
        thr_list.append(thr)                                   # (F, T)
        pm_list.append(pm)
    thresh_stab = 10.0 ** (np.stack(thr_list, axis=0) * 0.1)   # (B, F, T)
    psd_max_stab = 10.0 ** (np.array(pm_list) * 0.1)           # (B,)
    scale = (8.0 / 3.0) / (W * W) * (10.0 ** 9.6) / psd_max_stab   # (B,)

    # --- perturbation framing (JAX glue) -------------------------------------
    # Fold the per-batch PSD scale (quadratic in the STFT: s*|X|^2 == |sqrt(s)X|^2)
    # and the bf16 cast into the padded 1-D signal BEFORE the framing gather, so
    # the 4x-overlapping framed tensor is materialized at 2 bytes/element.
    # TODO(synk): fully in-kernel framing (hop-matrix input + 4 K=128 matmuls
    # against row-slices of the basis) would remove the 4x-overlap HBM
    # materialization entirely; left for a later pass.
    pert = x_adv - x_ref
    pert_pad = jnp.pad(pert, ((0, 0), (pad_len, pad_len)))
    Lp = L + 2 * pad_len
    T = 1 + (Lp - W) // H
    sqrt_scale = jnp.asarray(np.sqrt(scale), dtype=jnp.float32)
    pert_scaled = (pert_pad * sqrt_scale[:, None]).astype(jnp.bfloat16)  # (B, Lp)
    idx = np.arange(T)[:, None] * H + np.arange(W)[None, :]
    frames = pert_scaled[:, idx]                               # (B, T, W) bf16

    # --- flat row tiling: B*T frames in the matmul M dimension ---------------
    rows = B * T
    tile_t = min(512, -(-rows // 16) * 16)       # multiple of 16 (bf16 sublanes)
    n_tiles = -(-rows // tile_t)
    rows_padded = n_tiles * tile_t
    frames2d = jnp.pad(frames.reshape(rows, W),
                       ((0, rows_padded - rows), (0, 0)))      # (rows_padded, W)

    # --- packed thresholds: (rows_padded, 384) bf16, +inf in pad lanes/rows ---
    thr384 = np.full((rows_padded, N_THR_COLS), np.inf, dtype=np.float32)
    thr384[:rows, :F] = (thresh_stab.transpose(0, 2, 1)        # (B, T, F)
                         .reshape(rows, F).astype(np.float32))
    thresh2d = jnp.asarray(thr384, dtype=jnp.bfloat16)         # bf16 inf is exact

    # --- fused Hann-windowed DFT basis (bf16 MXU weights) ---------------------
    basis = jnp.asarray(_fused_dft_basis(W), dtype=jnp.bfloat16)   # (W, 512)

    out = _masking_hinge_row_sums(frames2d, basis, thresh2d, tile_t)
    row_sums = out[:rows, 0]                                   # (B*T,)
    loss = row_sums.reshape(B, T).sum(axis=-1) * (1.0 / float(F * T))
    return alpha * loss                                        # (B,)


# ----------------------------------------------------------------------------
# Host NumPy reference of the full forward (for validation)
# ----------------------------------------------------------------------------
def _reference_loss_numpy(x_adv, x_ref, alpha=ALPHA, window_size=WINDOW_SIZE,
                          hop_size=HOP_SIZE, sample_rate=SAMPLE_RATE):
    W, H = window_size, hop_size
    pad_len = (W // H - 1) * H
    B = x_adv.shape[0]
    x_ref_pad = np.pad(x_ref.astype(np.float64), ((0, 0), (pad_len, pad_len)))
    pert_pad = np.pad((x_adv - x_ref).astype(np.float64),
                      ((0, 0), (pad_len, pad_len)))
    win = _hann_window(W)
    T = 1 + (pert_pad.shape[-1] - W) // H
    idx = np.arange(T)[:, None] * H + np.arange(W)[None, :]
    losses = []
    for b in range(B):
        thr, pm = _threshold_and_psd_max(x_ref_pad[b], W, H, sample_rate)
        thr_stab = 10.0 ** (thr * 0.1)                          # (F, T)
        pm_stab = 10.0 ** (pm * 0.1)
        frames = pert_pad[b][idx] * win
        stft = np.fft.rfft(frames, axis=-1).T                  # (F, T)
        psd = (8.0 / 3.0) / (W * W) * np.abs(stft) ** 2
        psd_approx = (10.0 ** 9.6) / pm_stab * psd
        hinge = np.maximum(psd_approx - thr_stab, 0.0)
        losses.append(hinge.mean())
    return alpha * np.array(losses)


if __name__ == "__main__":
    key = jax.random.PRNGKey(0)
    k1, k2 = jax.random.split(key)
    B, L = 2, 1024
    x_ref = 0.5 * jax.random.normal(k1, (B, L), dtype=jnp.float32)
    x_adv = jax.random.normal(k2, (B, L), dtype=jnp.float32)

    loss = frequency_masking_loss(x_adv, x_ref)
    loss = jax.block_until_ready(loss)

    ref = _reference_loss_numpy(np.asarray(x_adv), np.asarray(x_ref))
    # bf16 frames / basis / thresholds (f32 accumulation) -> slightly looser
    # tolerance; observed error is well below this.
    np.testing.assert_allclose(np.asarray(loss), ref, rtol=4e-2, atol=1e-8)
    print("KERNEL_OK")
</pallas_src>

<mosaic_0001>
module attributes {stable_mosaic.version = 11 : i64} {
  func.func @_hinge_kernel(%arg0: i32, %arg1: memref<32x512xbf16, #tpu.memory_space<vmem>>, %arg2: memref<512x512xbf16, #tpu.memory_space<vmem>>, %arg3: memref<32x384xbf16, #tpu.memory_space<vmem>>, %arg4: memref<32x128xf32, #tpu.memory_space<vmem>>) attributes {dimension_semantics = [#tpu.dimension_semantics<parallel>], iteration_bounds = array<i64: 1>, scalar_prefetch = 0 : i64, scratch_operands = 0 : i64, tpu.core_type = #tpu.core_type<tc>, window_params = [{transform_indices = @transform_0, window_bounds = array<i64: 32, 512>}, {pipeline_mode = #tpu.pipeline_mode<synchronous>, transform_indices = @transform_1, window_bounds = array<i64: 512, 512>}, {transform_indices = @transform_2, window_bounds = array<i64: 32, 384>}, {transform_indices = @transform_3, window_bounds = array<i64: 32, 128>}]} {
    %c0 = arith.constant 0 : index
    %c0_0 = arith.constant 0 : index
    %0 = vector.load %arg1[%c0, %c0_0] : memref<32x512xbf16, #tpu.memory_space<vmem>>, vector<32x512xbf16>
    %c0_1 = arith.constant 0 : index
    %c0_2 = arith.constant 0 : index
    %1 = vector.load %arg2[%c0_1, %c0_2] : memref<512x512xbf16, #tpu.memory_space<vmem>>, vector<512x512xbf16>
    %cst = arith.constant dense<0.000000e+00> : vector<32x512xf32>
    %2 = tpu.matmul %0, %1, %cst {dimension_numbers = #tpu.dot_dimension_numbers<[1], [0], [0], [1], [0, 0, 1, 1], [], []>} : vector<32x512xbf16>, vector<512x512xbf16>, vector<32x512xf32> -> vector<32x512xf32>
    %3 = arith.mulf %2, %2 : vector<32x512xf32>
    %4 = vector.extract_strided_slice %3 {offsets = [0, 0], sizes = [32, 256], strides = [1, 1]} : vector<32x512xf32> to vector<32x256xf32>
    %5 = vector.extract_strided_slice %3 {offsets = [0, 256], sizes = [32, 256], strides = [1, 1]} : vector<32x512xf32> to vector<32x256xf32>
    %6 = tpu.iota {dimensions = array<i32: 1>} : vector<32x256xi32>
    %c0_i32 = arith.constant 0 : i32
    %7 = vector.broadcast %c0_i32 : i32 to vector<32x256xi32>
    %8 = arith.cmpi sgt, %6, %7 : vector<32x256xi32>
    %cst_3 = arith.constant 0.000000e+00 : f32
    %9 = vector.broadcast %cst_3 : f32 to vector<32x256xf32>
    %10 = arith.select %8, %5, %9 : vector<32x256xi1>, vector<32x256xf32>
    %11 = arith.addf %4, %10 : vector<32x256xf32>
    %c0_4 = arith.constant 0 : index
    %c0_5 = arith.constant 0 : index
    %12 = vector.load %arg3[%c0_4, %c0_5] : memref<32x384xbf16, #tpu.memory_space<vmem>>, vector<32x384xbf16>
    %13 = arith.extf %12 : vector<32x384xbf16> to vector<32x384xf32>
    %14 = vector.extract_strided_slice %13 {offsets = [0, 0], sizes = [32, 256], strides = [1, 1]} : vector<32x384xf32> to vector<32x256xf32>
    %15 = arith.subf %11, %14 : vector<32x256xf32>
    %cst_6 = arith.constant 0.000000e+00 : f32
    %16 = vector.broadcast %cst_6 : f32 to vector<32x256xf32>
    %17 = arith.maximumf %15, %16 : vector<32x256xf32>
    %18 = vector.extract_strided_slice %3 {offsets = [0, 256], sizes = [32, 128], strides = [1, 1]} : vector<32x512xf32> to vector<32x128xf32>
    %19 = vector.extract_strided_slice %13 {offsets = [0, 256], sizes = [32, 128], strides = [1, 1]} : vector<32x384xf32> to vector<32x128xf32>
    %20 = arith.subf %18, %19 : vector<32x128xf32>
    %cst_7 = arith.constant 0.000000e+00 : f32
    %21 = vector.broadcast %cst_7 : f32 to vector<32x128xf32>
    %22 = arith.maximumf %20, %21 : vector<32x128xf32>
    %cst_8 = arith.constant dense<0.000000e+00> : vector<32xf32>
    %23 = vector.multi_reduction <add>, %17, %cst_8 [1] : vector<32x256xf32> to vector<32xf32>
    %24 = vector.shape_cast %23 : vector<32xf32> to vector<32x1xf32>
    %cst_9 = arith.constant dense<0.000000e+00> : vector<32xf32>
    %25 = vector.multi_reduction <add>, %22, %cst_9 [1] : vector<32x128xf32> to vector<32xf32>
    %26 = vector.shape_cast %25 : vector<32xf32> to vector<32x1xf32>
    %27 = arith.addf %24, %26 : vector<32x1xf32>
    %28 = vector.shape_cast %27 : vector<32x1xf32> to vector<32x1xf32>
    %29 = vector.broadcast %28 : vector<32x1xf32> to vector<32x128xf32>
    %c0_10 = arith.constant 0 : index
    %c0_11 = arith.constant 0 : index
    %30 = vector.load %arg4[%c0_10, %c0_11] : memref<32x128xf32, #tpu.memory_space<vmem>>, vector<32x128xf32>
    tpu.vector_store %arg4[%c0_10, %c0_11], %29 {strides = array<i32>} : memref<32x128xf32, #tpu.memory_space<vmem>>, vector<32x128xf32>,
    return
  }
  func.func @transform_0(%arg0: i32) -> (i32, i32) {
    %c0_i32 = arith.constant 0 : i32
    %c0_i32_0 = arith.constant 0 : i32
    return %arg0, %c0_i32 : i32, i32
  }
  func.func @transform_1(%arg0: i32) -> (i32, i32) {
    %c0_i32 = arith.constant 0 : i32
    %c0_i32_0 = arith.constant 0 : i32
    %c0_i32_1 = arith.constant 0 : i32
    return %c0_i32, %c0_i32_0 : i32, i32
  }
  func.func @transform_2(%arg0: i32) -> (i32, i32) {
    %c0_i32 = arith.constant 0 : i32
    %c0_i32_0 = arith.constant 0 : i32
    return %arg0, %c0_i32 : i32, i32
  }
  func.func @transform_3(%arg0: i32) -> (i32, i32) {
    %c0_i32 = arith.constant 0 : i32
    %c0_i32_0 = arith.constant 0 : i32
    return %arg0, %c0_i32 : i32, i32
  }
}

</mosaic_0001>

<llo_original>
// kernel: tpu_custom_call.1
$region0: #{tpu_custom_call.1}
  #allocation0 [shape = 'u32[]', space=smem, size = 0x4, offset = 0x4, fixed_abs, tag = 'smem constant byte address 0x4 - core index']
  #allocation1 [shape = 'u32[144,128]{1,0:T(1,128)}', space=vmem, size = 0x12000, scoped, tag = 'internal scratch']
  %s0 = inlined_call_operand.hbm [shape: bf16[32,512], index: 0, kind: input, shape index: {}]
  %s1 = inlined_call_operand.hbm [shape: bf16[512,512], index: 1, kind: input, shape index: {}]
  %s2 = inlined_call_operand.hbm [shape: bf16[32,384], index: 2, kind: input, shape index: {}]
  %s3 = inlined_call_operand.hbm [shape: f32[32,128], index: 3, kind: output, shape index: {}]
  %s4 = sld [smem:[#allocation0]]
  $region34: #{tpu_custom_call.1} parent=0
    _
  %s6 = ssub.s32 1, %s4
  %s7 = scalar_select 0, %s6, %s4
  $region1: #{tpu_custom_call.1} parent=0
    #allocation2 [shape = 'u8[32768]{0}', space=vmem, size = 0x8000, scoped, tag = 'input window, operand 0, single buffered']
    #allocation3 [shape = 's32[1]{0}', space=sflag, size = 0x4, scoped, tag = 'scoped memory for tpu_custom_call.1']
    #allocation4 [shape = 's32[1]{0}', space=sflag, size = 0x4, scoped, tag = 'scoped memory for tpu_custom_call.1']
    #allocation5 [shape = 'u8[524288]{0}', space=vmem, size = 0x80000, scoped, tag = 'input window, operand 1, single buffered']
    #allocation6 [shape = 's32[1]{0}', space=sflag, size = 0x4, scoped, tag = 'scoped memory for tpu_custom_call.1']
    #allocation7 [shape = 'u8[24576]{0}', space=vmem, size = 0x6000, scoped, tag = 'input window, operand 2, single buffered']
    #allocation8 [shape = 'u8[16384]{0}', space=vmem, size = 0x4000, scoped, tag = 'output window, operand 0, single buffered']
    %8 = vsyncpa [#allocation3], 0
    %9 = vsyncpa [#allocation6], 0
    %10 = vsyncpa [#allocation4], 0
    // Predicated region
    $region2: #{tpu_custom_call.1} parent=1 // pred_check
      _
    $region3: #{tpu_custom_call.1} parent=1 // pred_check_branch
      %12 = sbr.rel (0) target = $region5
    $region4: #{tpu_custom_call.1} parent=1 // pred_region
      %s14 = ssub.s32 1024, 1024
      %15 = vsyncadd [#allocation3], %s14
      %s16 = sshll.u32 [#allocation2], 4
      %s17 = int_to_ptr.vmem [resolvable:$true] %s16
      %22 = dma.hbm_to_vmem [thread:$0]  %s0, 1024, %s17, [#allocation3], 256, 256, 16
    $region5: #{tpu_custom_call.1} parent=1 // pred_fallthru
      _
    // Predicated region
    $region6: #{tpu_custom_call.1} parent=1 // pred_check
      _
    $region7: #{tpu_custom_call.1} parent=1 // pred_check_branch
      %24 = sbr.rel (0) target = $region9
    $region8: #{tpu_custom_call.1} parent=1 // pred_region
      %s26 = ssub.s32 16384, 16384
      %27 = vsyncadd [#allocation6], %s26
      %s28 = sshll.u32 [#allocation5], 4
      %s29 = int_to_ptr.vmem [resolvable:$true] %s28
      %34 = dma.hbm_to_vmem [thread:$0]  %s1, 16384, %s29, [#allocation6], 256, 256, 16
    $region9: #{tpu_custom_call.1} parent=1 // pred_fallthru
      _
    // Predicated region
    $region10: #{tpu_custom_call.1} parent=1 // pred_check
      _
    $region11: #{tpu_custom_call.1} parent=1 // pred_check_branch
      %36 = sbr.rel (0) target = $region13
    $region12: #{tpu_custom_call.1} parent=1 // pred_region
      %s38 = ssub.s32 768, 768
      %39 = vsyncadd [#allocation6], %s38
      %s40 = sshll.u32 [#allocation7], 4
      %s41 = int_to_ptr.vmem [resolvable:$true] %s40
      %46 = dma.hbm_to_vmem [thread:$0]  %s2, 768, %s41, [#allocation6], 192, 192, 12
    $region13: #{tpu_custom_call.1} parent=1 // pred_fallthru
      _
    // Predicated region
    $region14: #{tpu_custom_call.1} parent=1 // pred_check
      _
    $region15: #{tpu_custom_call.1} parent=1 // pred_check_branch
      %48 = sbr.rel (0) target = $region17
    $region16: #{tpu_custom_call.1} parent=1 // pred_region
      %49 = dma.done [#allocation3], 1024
    $region17: #{tpu_custom_call.1} parent=1 // pred_fallthru
      _
    // Predicated region
    $region18: #{tpu_custom_call.1} parent=1 // pred_check
      _
    $region19: #{tpu_custom_call.1} parent=1 // pred_check_branch
      %51 = sbr.rel (0) target = $region21
    $region20: #{tpu_custom_call.1} parent=1 // pred_region
      %52 = dma.done [#allocation6], 16384
    $region21: #{tpu_custom_call.1} parent=1 // pred_fallthru
      _
    // Predicated region
    $region22: #{tpu_custom_call.1} parent=1 // pred_check
      _
    $region23: #{tpu_custom_call.1} parent=1 // pred_check_branch
      %54 = sbr.rel (0) target = $region25
    $region24: #{tpu_custom_call.1} parent=1 // pred_region
      %55 = dma.done [#allocation6], 768
    $region25: #{tpu_custom_call.1} parent=1 // pred_fallthru
      _
    %v56 = vld [vmem:[#allocation2] sm:$0xff]
    %v57 = vld [vmem:[#allocation2 + $0x8] sm:$0xff]
    %v58 = vld [vmem:[#allocation2 + $0x10] sm:$0xff]
    %v59 = vld [vmem:[#allocation2 + $0x18] sm:$0xff]
    %v60 = vld [vmem:[#allocation2 + $0x20] sm:$0xff]
    %v61 = vld [vmem:[#allocation2 + $0x28] sm:$0xff]
    %v62 = vld [vmem:[#allocation2 + $0x30] sm:$0xff]
    %v63 = vld [vmem:[#allocation2 + $0x38] sm:$0xff]
    %v64 = vld [vmem:[#allocation5] sm:$0xff]
    %v65 = vld [vmem:[#allocation5 + $0x8] sm:$0xff]
    %v66 = vld [vmem:[#allocation5 + $0x10] sm:$0xff]
    %v67 = vld [vmem:[#allocation5 + $0x18] sm:$0xff]
    %v68 = vld [vmem:[#allocation5 + $0x20] sm:$0xff]
    %v69 = vld [vmem:[#allocation5 + $0x28] sm:$0xff]
    %v70 = vld [vmem:[#allocation5 + $0x30] sm:$0xff]
    %v71 = vld [vmem:[#allocation5 + $0x38] sm:$0xff]
    %v72 = vld [vmem:[#allocation5 + $0x40] sm:$0xff]
    %v73 = vld [vmem:[#allocation5 + $0x48] sm:$0xff]
    %v74 = vld [vmem:[#allocation5 + $0x50] sm:$0xff]
    %v75 = vld [vmem:[#allocation5 + $0x58] sm:$0xff]
    %v76 = vld [vmem:[#allocation5 + $0x60] sm:$0xff]
    %v77 = vld [vmem:[#allocation5 + $0x68] sm:$0xff]
    %v78 = vld [vmem:[#allocation5 + $0x70] sm:$0xff]
    %v79 = vld [vmem:[#allocation5 + $0x78] sm:$0xff]
    %v80 = vld [vmem:[#allocation5 + $0x80] sm:$0xff]
    %v81 = vld [vmem:[#allocation5 + $0x88] sm:$0xff]
    %v82 = vld [vmem:[#allocation5 + $0x90] sm:$0xff]
    %v83 = vld [vmem:[#allocation5 + $0x98] sm:$0xff]
    %v84 = vld [vmem:[#allocation5 + $0xa0] sm:$0xff]
    %v85 = vld [vmem:[#allocation5 + $0xa8] sm:$0xff]
    %v86 = vld [vmem:[#allocation5 + $0xb0] sm:$0xff]
    %v87 = vld [vmem:[#allocation5 + $0xb8] sm:$0xff]
    %v88 = vld [vmem:[#allocation5 + $0xc0] sm:$0xff]
    %v89 = vld [vmem:[#allocation5 + $0xc8] sm:$0xff]
    %v90 = vld [vmem:[#allocation5 + $0xd0] sm:$0xff]
    %v91 = vld [vmem:[#allocation5 + $0xd8] sm:$0xff]
    %v92 = vld [vmem:[#allocation5 + $0xe0] sm:$0xff]
    %v93 = vld [vmem:[#allocation5 + $0xe8] sm:$0xff]
    %v94 = vld [vmem:[#allocation5 + $0xf0] sm:$0xff]
    %v95 = vld [vmem:[#allocation5 + $0xf8] sm:$0xff]
    %v96 = vld [vmem:[#allocation5 + $0x100] sm:$0xff]
    %v97 = vld [vmem:[#allocation5 + $0x108] sm:$0xff]
    %v98 = vld [vmem:[#allocation5 + $0x110] sm:$0xff]
    %v99 = vld [vmem:[#allocation5 + $0x118] sm:$0xff]
    %v100 = vld [vmem:[#allocation5 + $0x120] sm:$0xff]
    %v101 = vld [vmem:[#allocation5 + $0x128] sm:$0xff]
    %v102 = vld [vmem:[#allocation5 + $0x130] sm:$0xff]
    %v103 = vld [vmem:[#allocation5 + $0x138] sm:$0xff]
    %v104 = vld [vmem:[#allocation5 + $0x140] sm:$0xff]
    %v105 = vld [vmem:[#allocation5 + $0x148] sm:$0xff]
    %v106 = vld [vmem:[#allocation5 + $0x150] sm:$0xff]
    %v107 = vld [vmem:[#allocation5 + $0x158] sm:$0xff]
    %v108 = vld [vmem:[#allocation5 + $0x160] sm:$0xff]
    %v109 = vld [vmem:[#allocation5 + $0x168] sm:$0xff]
    %v110 = vld [vmem:[#allocation5 + $0x170] sm:$0xff]
    %v111 = vld [vmem:[#allocation5 + $0x178] sm:$0xff]
    %v112 = vld [vmem:[#allocation5 + $0x180] sm:$0xff]
    %v113 = vld [vmem:[#allocation5 + $0x188] sm:$0xff]
    %v114 = vld [vmem:[#allocation5 + $0x190] sm:$0xff]
    %v115 = vld [vmem:[#allocation5 + $0x198] sm:$0xff]
    %v116 = vld [vmem:[#allocation5 + $0x1a0] sm:$0xff]
    %v117 = vld [vmem:[#allocation5 + $0x1a8] sm:$0xff]
    %v118 = vld [vmem:[#allocation5 + $0x1b0] sm:$0xff]
    %v119 = vld [vmem:[#allocation5 + $0x1b8] sm:$0xff]
    %v120 = vld [vmem:[#allocation5 + $0x1c0] sm:$0xff]
    %v121 = vld [vmem:[#allocation5 + $0x1c8] sm:$0xff]
    %v122 = vld [vmem:[#allocation5 + $0x1d0] sm:$0xff]
    %v123 = vld [vmem:[#allocation5 + $0x1d8] sm:$0xff]
    %v124 = vld [vmem:[#allocation5 + $0x1e0] sm:$0xff]
    %v125 = vld [vmem:[#allocation5 + $0x1e8] sm:$0xff]
    %v126 = vld [vmem:[#allocation5 + $0x1f0] sm:$0xff]
    %v127 = vld [vmem:[#allocation5 + $0x1f8] sm:$0xff]
    %v128 = vld [vmem:[#allocation5 + $0x200] sm:$0xff]
    %v129 = vld [vmem:[#allocation5 + $0x208] sm:$0xff]
    %v130 = vld [vmem:[#allocation5 + $0x210] sm:$0xff]
    %v131 = vld [vmem:[#allocation5 + $0x218] sm:$0xff]
    %v132 = vld [vmem:[#allocation5 + $0x220] sm:$0xff]
    %v133 = vld [vmem:[#allocation5 + $0x228] sm:$0xff]
    %v134 = vld [vmem:[#allocation5 + $0x230] sm:$0xff]
    %v135 = vld [vmem:[#allocation5 + $0x238] sm:$0xff]
    %v136 = vld [vmem:[#allocation5 + $0x240] sm:$0xff]
    %v137 = vld [vmem:[#allocation5 + $0x248] sm:$0xff]
    %v138 = vld [vmem:[#allocation5 + $0x250] sm:$0xff]
    %v139 = vld [vmem:[#allocation5 + $0x258] sm:$0xff]
    %v140 = vld [vmem:[#allocation5 + $0x260] sm:$0xff]
    %v141 = vld [vmem:[#allocation5 + $0x268] sm:$0xff]
    %v142 = vld [vmem:[#allocation5 + $0x270] sm:$0xff]
    %v143 = vld [vmem:[#allocation5 + $0x278] sm:$0xff]
    %v144 = vld [vmem:[#allocation5 + $0x280] sm:$0xff]
    %v145 = vld [vmem:[#allocation5 + $0x288] sm:$0xff]
    %v146 = vld [vmem:[#allocation5 + $0x290] sm:$0xff]
    %v147 = vld [vmem:[#allocation5 + $0x298] sm:$0xff]
    %v148 = vld [vmem:[#allocation5 + $0x2a0] sm:$0xff]
    %v149 = vld [vmem:[#allocation5 + $0x2a8] sm:$0xff]
    %v150 = vld [vmem:[#allocation5 + $0x2b0] sm:$0xff]
    %v151 = vld [vmem:[#allocation5 + $0x2b8] sm:$0xff]
    %v152 = vld [vmem:[#allocation5 + $0x2c0] sm:$0xff]
    %v153 = vld [vmem:[#allocation5 + $0x2c8] sm:$0xff]
    %v154 = vld [vmem:[#allocation5 + $0x2d0] sm:$0xff]
    %v155 = vld [vmem:[#allocation5 + $0x2d8] sm:$0xff]
    %v156 = vld [vmem:[#allocation5 + $0x2e0] sm:$0xff]
    %v157 = vld [vmem:[#allocation5 + $0x2e8] sm:$0xff]
    %v158 = vld [vmem:[#allocation5 + $0x2f0] sm:$0xff]
    %v159 = vld [vmem:[#allocation5 + $0x2f8] sm:$0xff]
    %v160 = vld [vmem:[#allocation5 + $0x300] sm:$0xff]
    %v161 = vld [vmem:[#allocation5 + $0x308] sm:$0xff]
    %v162 = vld [vmem:[#allocation5 + $0x310] sm:$0xff]
    %v163 = vld [vmem:[#allocation5 + $0x318] sm:$0xff]
    %v164 = vld [vmem:[#allocation5 + $0x320] sm:$0xff]
    %v165 = vld [vmem:[#allocation5 + $0x328] sm:$0xff]
    %v166 = vld [vmem:[#allocation5 + $0x330] sm:$0xff]
    %v167 = vld [vmem:[#allocation5 + $0x338] sm:$0xff]
    %v168 = vld [vmem:[#allocation5 + $0x340] sm:$0xff]
    %v169 = vld [vmem:[#allocation5 + $0x348] sm:$0xff]
    %v170 = vld [vmem:[#allocation5 + $0x350] sm:$0xff]
    %v171 = vld [vmem:[#allocation5 + $0x358] sm:$0xff]
    %v172 = vld [vmem:[#allocation5 + $0x360] sm:$0xff]
    %v173 = vld [vmem:[#allocation5 + $0x368] sm:$0xff]
    %v174 = vld [vmem:[#allocation5 + $0x370] sm:$0xff]
    %v175 = vld [vmem:[#allocation5 + $0x378] sm:$0xff]
    %v176 = vld [vmem:[#allocation5 + $0x380] sm:$0xff]
    %v177 = vld [vmem:[#allocation5 + $0x388] sm:$0xff]
    %v178 = vld [vmem:[#allocation5 + $0x390] sm:$0xff]
    %v179 = vld [vmem:[#allocation5 + $0x398] sm:$0xff]
    %v180 = vld [vmem:[#allocation5 + $0x3a0] sm:$0xff]
    %v181 = vld [vmem:[#allocation5 + $0x3a8] sm:$0xff]
    %v182 = vld [vmem:[#allocation5 + $0x3b0] sm:$0xff]
    %v183 = vld [vmem:[#allocation5 + $0x3b8] sm:$0xff]
    %v184 = vld [vmem:[#allocation5 + $0x3c0] sm:$0xff]
    %v185 = vld [vmem:[#allocation5 + $0x3c8] sm:$0xff]
    %v186 = vld [vmem:[#allocation5 + $0x3d0] sm:$0xff]
    %v187 = vld [vmem:[#allocation5 + $0x3d8] sm:$0xff]
    %v188 = vld [vmem:[#allocation5 + $0x3e0] sm:$0xff]
    %v189 = vld [vmem:[#allocation5 + $0x3e8] sm:$0xff]
    %v190 = vld [vmem:[#allocation5 + $0x3f0] sm:$0xff]
    %v191 = vld [vmem:[#allocation5 + $0x3f8] sm:$0xff]
    %v200 = vunpack.c.l.b16 %v56
    %v201 = vunpack.c.h.b16 %v56
    %v202 = vunpack.c.l.b16 %v57
    %v203 = vunpack.c.h.b16 %v57
    %v204 = vunpack.c.l.b16 %v58
    %v205 = vunpack.c.h.b16 %v58
    %v206 = vunpack.c.l.b16 %v59
    %v207 = vunpack.c.h.b16 %v59
    %v208 = vunpack.c.l.b16 %v60
    %v209 = vunpack.c.h.b16 %v60
    %v210 = vunpack.c.l.b16 %v61
    %v211 = vunpack.c.h.b16 %v61
    %v212 = vunpack.c.l.b16 %v62
    %v213 = vunpack.c.h.b16 %v62
    %v214 = vunpack.c.l.b16 %v63
    %v215 = vunpack.c.h.b16 %v63
    %v216 = vpack.c.b16 %v204, %v200
    %v217 = vpack.c.b16 %v205, %v201
    %v218 = vpack.c.b16 %v206, %v202
    %v219 = vpack.c.b16 %v207, %v203
    %v220 = vpack.c.b16 %v212, %v208
    %v221 = vpack.c.b16 %v213, %v209
    %v222 = vpack.c.b16 %v214, %v210
    %v223 = vpack.c.b16 %v215, %v211
    %v360 = vunpack.c.l.b16 %v64
    %v361 = vunpack.c.h.b16 %v64
    %v362 = vunpack.c.l.b16 %v65
    %v363 = vunpack.c.h.b16 %v65
    %v364 = vunpack.c.l.b16 %v66
    %v365 = vunpack.c.h.b16 %v66
    %v366 = vunpack.c.l.b16 %v67
    %v367 = vunpack.c.h.b16 %v67
    %v368 = vunpack.c.l.b16 %v68
    %v369 = vunpack.c.h.b16 %v68
    %v370 = vunpack.c.l.b16 %v69
    %v371 = vunpack.c.h.b16 %v69
    %v372 = vunpack.c.l.b16 %v70
    %v373 = vunpack.c.h.b16 %v70
    %v374 = vunpack.c.l.b16 %v71
    %v375 = vunpack.c.h.b16 %v71
    %v376 = vunpack.c.l.b16 %v72
    %v377 = vunpack.c.h.b16 %v72
    %v378 = vunpack.c.l.b16 %v73
    %v379 = vunpack.c.h.b16 %v73
    %v380 = vunpack.c.l.b16 %v74
    %v381 = vunpack.c.h.b16 %v74
    %v382 = vunpack.c.l.b16 %v75
    %v383 = vunpack.c.h.b16 %v75
    %v384 = vunpack.c.l.b16 %v76
    %v385 = vunpack.c.h.b16 %v76
    %v386 = vunpack.c.l.b16 %v77
    %v387 = vunpack.c.h.b16 %v77
    %v388 = vunpack.c.l.b16 %v78
    %v389 = vunpack.c.h.b16 %v78
    %v390 = vunpack.c.l.b16 %v79
    %v391 = vunpack.c.h.b16 %v79
    %v392 = vunpack.c.l.b16 %v80
    %v393 = vunpack.c.h.b16 %v80
    %v394 = vunpack.c.l.b16 %v81
    %v395 = vunpack.c.h.b16 %v81
    %v396 = vunpack.c.l.b16 %v82
    %v397 = vunpack.c.h.b16 %v82
    %v398 = vunpack.c.l.b16 %v83
    %v399 = vunpack.c.h.b16 %v83
    %v400 = vunpack.c.l.b16 %v84
    %v401 = vunpack.c.h.b16 %v84
    %v402 = vunpack.c.l.b16 %v85
    %v403 = vunpack.c.h.b16 %v85
    %v404 = vunpack.c.l.b16 %v86
    %v405 = vunpack.c.h.b16 %v86
    %v406 = vunpack.c.l.b16 %v87
    %v407 = vunpack.c.h.b16 %v87
    %v408 = vunpack.c.l.b16 %v88
    %v409 = vunpack.c.h.b16 %v88
    %v410 = vunpack.c.l.b16 %v89
    %v411 = vunpack.c.h.b16 %v89
    %v412 = vunpack.c.l.b16 %v90
    %v413 = vunpack.c.h.b16 %v90
    %v414 = vunpack.c.l.b16 %v91
    %v415 = vunpack.c.h.b16 %v91
    %v416 = vunpack.c.l.b16 %v92
    %v417 = vunpack.c.h.b16 %v92
    %v418 = vunpack.c.l.b16 %v93
    %v419 = vunpack.c.h.b16 %v93
    %v420 = vunpack.c.l.b16 %v94
    %v421 = vunpack.c.h.b16 %v94
    %v422 = vunpack.c.l.b16 %v95
    %v423 = vunpack.c.h.b16 %v95
    %v424 = vunpack.c.l.b16 %v96
    %v425 = vunpack.c.h.b16 %v96
    %v426 = vunpack.c.l.b16 %v97
    %v427 = vunpack.c.h.b16 %v97
    %v428 = vunpack.c.l.b16 %v98
    %v429 = vunpack.c.h.b16 %v98
    %v430 = vunpack.c.l.b16 %v99
    %v431 = vunpack.c.h.b16 %v99
    %v432 = vunpack.c.l.b16 %v100
    %v433 = vunpack.c.h.b16 %v100
    %v434 = vunpack.c.l.b16 %v101
    %v435 = vunpack.c.h.b16 %v101
    %v436 = vunpack.c.l.b16 %v102
    %v437 = vunpack.c.h.b16 %v102
    %v438 = vunpack.c.l.b16 %v103
    %v439 = vunpack.c.h.b16 %v103
    %v440 = vunpack.c.l.b16 %v104
    %v441 = vunpack.c.h.b16 %v104
    %v442 = vunpack.c.l.b16 %v105
    %v443 = vunpack.c.h.b16 %v105
    %v444 = vunpack.c.l.b16 %v106
    %v445 = vunpack.c.h.b16 %v106
    %v446 = vunpack.c.l.b16 %v107
    %v447 = vunpack.c.h.b16 %v107
    %v448 = vunpack.c.l.b16 %v108
    %v449 = vunpack.c.h.b16 %v108
    %v450 = vunpack.c.l.b16 %v109
    %v451 = vunpack.c.h.b16 %v109
    %v452 = vunpack.c.l.b16 %v110
    %v453 = vunpack.c.h.b16 %v110
    %v454 = vunpack.c.l.b16 %v111
    %v455 = vunpack.c.h.b16 %v111
    %v456 = vunpack.c.l.b16 %v112
    %v457 = vunpack.c.h.b16 %v112
    %v458 = vunpack.c.l.b16 %v113
    %v459 = vunpack.c.h.b16 %v113
    %v460 = vunpack.c.l.b16 %v114
    %v461 = vunpack.c.h.b16 %v114
    %v462 = vunpack.c.l.b16 %v115
    %v463 = vunpack.c.h.b16 %v115
    %v464 = vunpack.c.l.b16 %v116
    %v465 = vunpack.c.h.b16 %v116
    %v466 = vunpack.c.l.b16 %v117
    %v467 = vunpack.c.h.b16 %v117
    %v468 = vunpack.c.l.b16 %v118
    %v469 = vunpack.c.h.b16 %v118
    %v470 = vunpack.c.l.b16 %v119
    %v471 = vunpack.c.h.b16 %v119
    %v472 = vunpack.c.l.b16 %v120
    %v473 = vunpack.c.h.b16 %v120
    %v474 = vunpack.c.l.b16 %v121
    %v475 = vunpack.c.h.b16 %v121
    %v476 = vunpack.c.l.b16 %v122
    %v477 = vunpack.c.h.b16 %v122
    %v478 = vunpack.c.l.b16 %v123
    %v479 = vunpack.c.h.b16 %v123
    %v480 = vunpack.c.l.b16 %v124
    %v481 = vunpack.c.h.b16 %v124
    %v482 = vunpack.c.l.b16 %v125
    %v483 = vunpack.c.h.b16 %v125
    %v484 = vunpack.c.l.b16 %v126
    %v485 = vunpack.c.h.b16 %v126
    %v486 = vunpack.c.l.b16 %v127
    %v487 = vunpack.c.h.b16 %v127
    %v488 = vunpack.c.l.b16 %v128
    %v489 = vunpack.c.h.b16 %v128
    %v490 = vunpack.c.l.b16 %v129
    %v491 = vunpack.c.h.b16 %v129
    %v492 = vunpack.c.l.b16 %v130
    %v493 = vunpack.c.h.b16 %v130
    %v494 = vunpack.c.l.b16 %v131
    %v495 = vunpack.c.h.b16 %v131
    %v496 = vunpack.c.l.b16 %v132
    %v497 = vunpack.c.h.b16 %v132
    %v498 = vunpack.c.l.b16 %v133
    %v499 = vunpack.c.h.b16 %v133
    %v500 = vunpack.c.l.b16 %v134
    %v501 = vunpack.c.h.b16 %v134
    %v502 = vunpack.c.l.b16 %v135
    %v503 = vunpack.c.h.b16 %v135
    %v504 = vunpack.c.l.b16 %v136
    %v505 = vunpack.c.h.b16 %v136
    %v506 = vunpack.c.l.b16 %v137
    %v507 = vunpack.c.h.b16 %v137
    %v508 = vunpack.c.l.b16 %v138
    %v509 = vunpack.c.h.b16 %v138
    %v510 = vunpack.c.l.b16 %v139
    %v511 = vunpack.c.h.b16 %v139
    %v512 = vunpack.c.l.b16 %v140
    %v513 = vunpack.c.h.b16 %v140
    %v514 = vunpack.c.l.b16 %v141
    %v515 = vunpack.c.h.b16 %v141
    %v516 = vunpack.c.l.b16 %v142
    %v517 = vunpack.c.h.b16 %v142
    %v518 = vunpack.c.l.b16 %v143
    %v519 = vunpack.c.h.b16 %v143
    %v520 = vunpack.c.l.b16 %v144
    %v521 = vunpack.c.h.b16 %v144
    %v522 = vunpack.c.l.b16 %v145
    %v523 = vunpack.c.h.b16 %v145
    %v524 = vunpack.c.l.b16 %v146
    %v525 = vunpack.c.h.b16 %v146
    %v526 = vunpack.c.l.b16 %v147
    %v527 = vunpack.c.h.b16 %v147
    %v528 = vunpack.c.l.b16 %v148
    %v529 = vunpack.c.h.b16 %v148
    %v530 = vunpack.c.l.b16 %v149
    %v531 = vunpack.c.h.b16 %v149
    %v532 = vunpack.c.l.b16 %v150
    %v533 = vunpack.c.h.b16 %v150
    %v534 = vunpack.c.l.b16 %v151
    %v535 = vunpack.c.h.b16 %v151
    %v536 = vunpack.c.l.b16 %v152
    %v537 = vunpack.c.h.b16 %v152
    %v538 = vunpack.c.l.b16 %v153
    %v539 = vunpack.c.h.b16 %v153
    %v540 = vunpack.c.l.b16 %v154
    %v541 = vunpack.c.h.b16 %v154
    %v542 = vunpack.c.l.b16 %v155
    %v543 = vunpack.c.h.b16 %v155
    %v544 = vunpack.c.l.b16 %v156
    %v545 = vunpack.c.h.b16 %v156
    %v546 = vunpack.c.l.b16 %v157
    %v547 = vunpack.c.h.b16 %v157
    %v548 = vunpack.c.l.b16 %v158
    %v549 = vunpack.c.h.b16 %v158
    %v550 = vunpack.c.l.b16 %v159
    %v551 = vunpack.c.h.b16 %v159
    %v552 = vunpack.c.l.b16 %v160
    %v553 = vunpack.c.h.b16 %v160
    %v554 = vunpack.c.l.b16 %v161
    %v555 = vunpack.c.h.b16 %v161
    %v556 = vunpack.c.l.b16 %v162
    %v557 = vunpack.c.h.b16 %v162
    %v558 = vunpack.c.l.b16 %v163
    %v559 = vunpack.c.h.b16 %v163
    %v560 = vunpack.c.l.b16 %v164
    %v561 = vunpack.c.h.b16 %v164
    %v562 = vunpack.c.l.b16 %v165
    %v563 = vunpack.c.h.b16 %v165
    %v564 = vunpack.c.l.b16 %v166
    %v565 = vunpack.c.h.b16 %v166
    %v566 = vunpack.c.l.b16 %v167
    %v567 = vunpack.c.h.b16 %v167
    %v568 = vunpack.c.l.b16 %v168
    %v569 = vunpack.c.h.b16 %v168
    %v570 = vunpack.c.l.b16 %v169
    %v571 = vunpack.c.h.b16 %v169
    %v572 = vunpack.c.l.b16 %v170
    %v573 = vunpack.c.h.b16 %v170
    %v574 = vunpack.c.l.b16 %v171
    %v575 = vunpack.c.h.b16 %v171
    %v576 = vunpack.c.l.b16 %v172
    %v577 = vunpack.c.h.b16 %v172
    %v578 = vunpack.c.l.b16 %v173
    %v579 = vunpack.c.h.b16 %v173
    %v580 = vunpack.c.l.b16 %v174
    %v581 = vunpack.c.h.b16 %v174
    %v582 = vunpack.c.l.b16 %v175
    %v583 = vunpack.c.h.b16 %v175
    %v584 = vunpack.c.l.b16 %v176
    %v585 = vunpack.c.h.b16 %v176
    %v586 = vunpack.c.l.b16 %v177
    %v587 = vunpack.c.h.b16 %v177
    %v588 = vunpack.c.l.b16 %v178
    %v589 = vunpack.c.h.b16 %v178
    %v590 = vunpack.c.l.b16 %v179
    %v591 = vunpack.c.h.b16 %v179
    %v592 = vunpack.c.l.b16 %v180
    %v593 = vunpack.c.h.b16 %v180
    %v594 = vunpack.c.l.b16 %v181
    %v595 = vunpack.c.h.b16 %v181
    %v596 = vunpack.c.l.b16 %v182
    %v597 = vunpack.c.h.b16 %v182
    %v598 = vunpack.c.l.b16 %v183
    %v599 = vunpack.c.h.b16 %v183
    %v600 = vunpack.c.l.b16 %v184
    %v601 = vunpack.c.h.b16 %v184
    %v602 = vunpack.c.l.b16 %v185
    %v603 = vunpack.c.h.b16 %v185
    %v604 = vunpack.c.l.b16 %v186
    %v605 = vunpack.c.h.b16 %v186
    %v606 = vunpack.c.l.b16 %v187
    %v607 = vunpack.c.h.b16 %v187
    %v608 = vunpack.c.l.b16 %v188
    %v609 = vunpack.c.h.b16 %v188
    %v610 = vunpack.c.l.b16 %v189
    %v611 = vunpack.c.h.b16 %v189
    %v612 = vunpack.c.l.b16 %v190
    %v613 = vunpack.c.h.b16 %v190
    %v614 = vunpack.c.l.b16 %v191
    %v615 = vunpack.c.h.b16 %v191
    %v616 = vpack.c.b16 %v364, %v360
    %v617 = vpack.c.b16 %v365, %v361
    %v618 = vpack.c.b16 %v366, %v362
    %v619 = vpack.c.b16 %v367, %v363
    %v620 = vpack.c.b16 %v372, %v368
    %v621 = vpack.c.b16 %v373, %v369
    %v622 = vpack.c.b16 %v374, %v370
    %v623 = vpack.c.b16 %v375, %v371
    %v624 = vpack.c.b16 %v380, %v376
    %v625 = vpack.c.b16 %v381, %v377
    %v626 = vpack.c.b16 %v382, %v378
    %v627 = vpack.c.b16 %v383, %v379
    %v628 = vpack.c.b16 %v388, %v384
    %v629 = vpack.c.b16 %v389, %v385
    %v630 = vpack.c.b16 %v390, %v386
    %v631 = vpack.c.b16 %v391, %v387
    %v632 = vpack.c.b16 %v396, %v392
    %v633 = vpack.c.b16 %v397, %v393
    %v634 = vpack.c.b16 %v398, %v394
    %v635 = vpack.c.b16 %v399, %v395
    %v636 = vpack.c.b16 %v404, %v400
    %v637 = vpack.c.b16 %v405, %v401
    %v638 = vpack.c.b16 %v406, %v402
    %v639 = vpack.c.b16 %v407, %v403
    %v640 = vpack.c.b16 %v412, %v408
    %v641 = vpack.c.b16 %v413, %v409
    %v642 = vpack.c.b16 %v414, %v410
    %v643 = vpack.c.b16 %v415, %v411
    %v644 = vpack.c.b16 %v420, %v416
    %v645 = vpack.c.b16 %v421, %v417
    %v646 = vpack.c.b16 %v422, %v418
    %v647 = vpack.c.b16 %v423, %v419
    %v648 = vpack.c.b16 %v428, %v424
    %v649 = vpack.c.b16 %v429, %v425
    %v650 = vpack.c.b16 %v430, %v426
    %v651 = vpack.c.b16 %v431, %v427
    %v652 = vpack.c.b16 %v436, %v432
    %v653 = vpack.c.b16 %v437, %v433
    %v654 = vpack.c.b16 %v438, %v434
    %v655 = vpack.c.b16 %v439, %v435
    %v656 = vpack.c.b16 %v444, %v440
    %v657 = vpack.c.b16 %v445, %v441
    %v658 = vpack.c.b16 %v446, %v442
    %v659 = vpack.c.b16 %v447, %v443
    %v660 = vpack.c.b16 %v452, %v448
    %v661 = vpack.c.b16 %v453, %v449
    %v662 = vpack.c.b16 %v454, %v450
    %v663 = vpack.c.b16 %v455, %v451
    %v664 = vpack.c.b16 %v460, %v456
    %v665 = vpack.c.b16 %v461, %v457
    %v666 = vpack.c.b16 %v462, %v458
    %v667 = vpack.c.b16 %v463, %v459
    %v668 = vpack.c.b16 %v468, %v464
    %v669 = vpack.c.b16 %v469, %v465
    %v670 = vpack.c.b16 %v470, %v466
    %v671 = vpack.c.b16 %v471, %v467
    %v672 = vpack.c.b16 %v476, %v472
    %v673 = vpack.c.b16 %v477, %v473
    %v674 = vpack.c.b16 %v478, %v474
    %v675 = vpack.c.b16 %v479, %v475
    %v676 = vpack.c.b16 %v484, %v480
    %v677 = vpack.c.b16 %v485, %v481
    %v678 = vpack.c.b16 %v486, %v482
    %v679 = vpack.c.b16 %v487, %v483
    %v680 = vpack.c.b16 %v492, %v488
    %v681 = vpack.c.b16 %v493, %v489
    %v682 = vpack.c.b16 %v494, %v490
    %v683 = vpack.c.b16 %v495, %v491
    %v684 = vpack.c.b16 %v500, %v496
    %v685 = vpack.c.b16 %v501, %v497
    %v686 = vpack.c.b16 %v502, %v498
    %v687 = vpack.c.b16 %v503, %v499
    %v688 = vpack.c.b16 %v508, %v504
    %v689 = vpack.c.b16 %v509, %v505
    %v690 = vpack.c.b16 %v510, %v506
    %v691 = vpack.c.b16 %v511, %v507
    %v692 = vpack.c.b16 %v516, %v512
    %v693 = vpack.c.b16 %v517, %v513
    %v694 = vpack.c.b16 %v518, %v514
    %v695 = vpack.c.b16 %v519, %v515
    %v696 = vpack.c.b16 %v524, %v520
    %v697 = vpack.c.b16 %v525, %v521
    %v698 = vpack.c.b16 %v526, %v522
    %v699 = vpack.c.b16 %v527, %v523
    %v700 = vpack.c.b16 %v532, %v528
    %v701 = vpack.c.b16 %v533, %v529
    %v702 = vpack.c.b16 %v534, %v530
    %v703 = vpack.c.b16 %v535, %v531
    %v704 = vpack.c.b16 %v540, %v536
    %v705 = vpack.c.b16 %v541, %v537
    %v706 = vpack.c.b16 %v542, %v538
    %v707 = vpack.c.b16 %v543, %v539
    %v708 = vpack.c.b16 %v548, %v544
    %v709 = vpack.c.b16 %v549, %v545
    %v710 = vpack.c.b16 %v550, %v546
    %v711 = vpack.c.b16 %v551, %v547
    %v712 = vpack.c.b16 %v556, %v552
    %v713 = vpack.c.b16 %v557, %v553
    %v714 = vpack.c.b16 %v558, %v554
    %v715 = vpack.c.b16 %v559, %v555
    %v716 = vpack.c.b16 %v564, %v560
    %v717 = vpack.c.b16 %v565, %v561
    %v718 = vpack.c.b16 %v566, %v562
    %v719 = vpack.c.b16 %v567, %v563
    %v720 = vpack.c.b16 %v572, %v568
    %v721 = vpack.c.b16 %v573, %v569
    %v722 = vpack.c.b16 %v574, %v570
    %v723 = vpack.c.b16 %v575, %v571
    %v724 = vpack.c.b16 %v580, %v576
    %v725 = vpack.c.b16 %v581, %v577
    %v726 = vpack.c.b16 %v582, %v578
    %v727 = vpack.c.b16 %v583, %v579
    %v728 = vpack.c.b16 %v588, %v584
    %v729 = vpack.c.b16 %v589, %v585
    %v730 = vpack.c.b16 %v590, %v586
    %v731 = vpack.c.b16 %v591, %v587
    %v732 = vpack.c.b16 %v596, %v592
    %v733 = vpack.c.b16 %v597, %v593
    %v734 = vpack.c.b16 %v598, %v594
    %v735 = vpack.c.b16 %v599, %v595
    %v736 = vpack.c.b16 %v604, %v600
    %v737 = vpack.c.b16 %v605, %v601
    %v738 = vpack.c.b16 %v606, %v602
    %v739 = vpack.c.b16 %v607, %v603
    %v740 = vpack.c.b16 %v612, %v608
    %v741 = vpack.c.b16 %v613, %v609
    %v742 = vpack.c.b16 %v614, %v610
    %v743 = vpack.c.b16 %v615, %v611
    %872 = vmatprep.subr.bf16.mxu0 %v617
    %873 = vmatpush1.bf16.msra.mxu0 %v616
    %874 = vmatprep.subr.bf16.mxu0 %v621
    %875 = vmatpush1.bf16.msra.mxu0 %v620
    %876 = vmatprep.subr.bf16.mxu0 %v625
    %877 = vmatpush1.bf16.msra.mxu0 %v624
    %878 = vmatprep.subr.bf16.mxu0 %v629
    %879 = vmatpush1.bf16.msra.mxu0 %v628
    %880 = vmatprep.subr.bf16.mxu0 %v633
    %881 = vmatpush1.bf16.msra.mxu0 %v632
    %882 = vmatprep.subr.bf16.mxu0 %v637
    %883 = vmatpush1.bf16.msra.mxu0 %v636
    %884 = vmatprep.subr.bf16.mxu0 %v641
    %885 = vmatpush1.bf16.msra.mxu0 %v640
    %886 = vmatprep.subr.bf16.mxu0 %v645
    %887 = vmatpush1.bf16.msra.mxu0 %v644
    %888 = vmatprep.subr.bf16.mxu0 %v649
    %889 = vmatpush1.bf16.msra.mxu0 %v648
    %890 = vmatprep.subr.bf16.mxu0 %v653
    %891 = vmatpush1.bf16.msra.mxu0 %v652
    %892 = vmatprep.subr.bf16.mxu0 %v657
    %893 = vmatpush1.bf16.msra.mxu0 %v656
    %894 = vmatprep.subr.bf16.mxu0 %v661
    %895 = vmatpush1.bf16.msra.mxu0 %v660
    %896 = vmatprep.subr.bf16.mxu0 %v665
    %897 = vmatpush1.bf16.msra.mxu0 %v664
    %898 = vmatprep.subr.bf16.mxu0 %v669
    %899 = vmatpush1.bf16.msra.mxu0 %v668
    %900 = vmatprep.subr.bf16.mxu0 %v673
    %901 = vmatpush1.bf16.msra.mxu0 %v672
    %902 = vmatprep.subr.bf16.mxu0 %v677
    %903 = vmatpush1.bf16.msra.mxu0 %v676
    %904 = vmatprep.mubr.bf16.mxu0 %v217
    %905 = vmatmul.mubr.bf16.gmra.mrb[0].mxu0 %v216
    %v906 = vpop.f32.mrb[0].mxu0
    %v907 = vadd.f32 0.0, %v906
    %v908 = vpop.f32.mrb[0].mxu0
    %v909 = vadd.f32 0.0, %v908
    %v910 = vpop.f32.mrb[0].mxu0
    %v911 = vadd.f32 0.0, %v910
    %v912 = vpop.f32.mrb[0].mxu0
    %v913 = vadd.f32 0.0, %v912
    %914 = vmatprep.mubr.bf16.mxu0 %v221
    %915 = vmatmul.mubr.bf16.gmra.mrb[0].mxu0 %v220
    %v916 = vpop.f32.mrb[0].mxu0
    %v917 = vadd.f32 0.0, %v916
    %v918 = vpop.f32.mrb[0].mxu0
    %v919 = vadd.f32 0.0, %v918
    %v920 = vpop.f32.mrb[0].mxu0
    %v921 = vadd.f32 0.0, %v920
    %v922 = vpop.f32.mrb[0].mxu0
    %v923 = vadd.f32 0.0, %v922
    %924 = vdwg.mxu0
    %925 = vmatprep.subr.bf16.mxu0 %v681
    %926 = vmatpush1.bf16.msra.mxu0 %v680
    %927 = vmatprep.subr.bf16.mxu0 %v685
    %928 = vmatpush1.bf16.msra.mxu0 %v684
    %929 = vmatprep.subr.bf16.mxu0 %v689
    %930 = vmatpush1.bf16.msra.mxu0 %v688
    %931 = vmatprep.subr.bf16.mxu0 %v693
    %932 = vmatpush1.bf16.msra.mxu0 %v692
    %933 = vmatprep.subr.bf16.mxu0 %v697
    %934 = vmatpush1.bf16.msra.mxu0 %v696
    %935 = vmatprep.subr.bf16.mxu0 %v701
    %936 = vmatpush1.bf16.msra.mxu0 %v700
    %937 = vmatprep.subr.bf16.mxu0 %v705
    %938 = vmatpush1.bf16.msra.mxu0 %v704
    %939 = vmatprep.subr.bf16.mxu0 %v709
    %940 = vmatpush1.bf16.msra.mxu0 %v708
    %941 = vmatprep.subr.bf16.mxu0 %v713
    %942 = vmatpush1.bf16.msra.mxu0 %v712
    %943 = vmatprep.subr.bf16.mxu0 %v717
    %944 = vmatpush1.bf16.msra.mxu0 %v716
    %945 = vmatprep.subr.bf16.mxu0 %v721
    %946 = vmatpush1.bf16.msra.mxu0 %v720
    %947 = vmatprep.subr.bf16.mxu0 %v725
    %948 = vmatpush1.bf16.msra.mxu0 %v724
    %949 = vmatprep.subr.bf16.mxu0 %v729
    %950 = vmatpush1.bf16.msra.mxu0 %v728
    %951 = vmatprep.subr.bf16.mxu0 %v733
    %952 = vmatpush1.bf16.msra.mxu0 %v732
    %953 = vmatprep.subr.bf16.mxu0 %v737
    %954 = vmatpush1.bf16.msra.mxu0 %v736
    %955 = vmatprep.subr.bf16.mxu0 %v741
    %956 = vmatpush1.bf16.msra.mxu0 %v740
    %957 = vmatprep.mubr.bf16.mxu0 %v219
    %958 = vmatmul.mubr.bf16.gmra.mrb[0].mxu0 %v218
    %v959 = vpop.f32.mrb[0].mxu0
    %v960 = vadd.f32 %v907, %v959
    %v961 = vpop.f32.mrb[0].mxu0
    %v962 = vadd.f32 %v909, %v961
    %v963 = vpop.f32.mrb[0].mxu0
    %v964 = vadd.f32 %v911, %v963
    %v965 = vpop.f32.mrb[0].mxu0
    %v966 = vadd.f32 %v913, %v965
    %967 = vmatprep.mubr.bf16.mxu0 %v223
    %968 = vmatmul.mubr.bf16.gmra.mrb[0].mxu0 %v222
    %v969 = vpop.f32.mrb[0].mxu0
    %v970 = vadd.f32 %v917, %v969
    %v971 = vpop.f32.mrb[0].mxu0
    %v972 = vadd.f32 %v919, %v971
    %v973 = vpop.f32.mrb[0].mxu0
    %v974 = vadd.f32 %v921, %v973
    %v975 = vpop.f32.mrb[0].mxu0
    %v976 = vadd.f32 %v923, %v975
    %977 = vdwg.mxu0
    %978 = vmatprep.subr.bf16.mxu0 %v619
    %979 = vmatpush1.bf16.msra.mxu0 %v618
    %980 = vmatprep.subr.bf16.mxu0 %v623
    %981 = vmatpush1.bf16.msra.mxu0 %v622
    %982 = vmatprep.subr.bf16.mxu0 %v627
    %983 = vmatpush1.bf16.msra.mxu0 %v626
    %984 = vmatprep.subr.bf16.mxu0 %v631
    %985 = vmatpush1.bf16.msra.mxu0 %v630
    %986 = vmatprep.subr.bf16.mxu0 %v635
    %987 = vmatpush1.bf16.msra.mxu0 %v634
    %988 = vmatprep.subr.bf16.mxu0 %v639
    %989 = vmatpush1.bf16.msra.mxu0 %v638
    %990 = vmatprep.subr.bf16.mxu0 %v643
    %991 = vmatpush1.bf16.msra.mxu0 %v642
    %992 = vmatprep.subr.bf16.mxu0 %v647
    %993 = vmatpush1.bf16.msra.mxu0 %v646
    %994 = vmatprep.subr.bf16.mxu0 %v651
    %995 = vmatpush1.bf16.msra.mxu0 %v650
    %996 = vmatprep.subr.bf16.mxu0 %v655
    %997 = vmatpush1.bf16.msra.mxu0 %v654
    %998 = vmatprep.subr.bf16.mxu0 %v659
    %999 = vmatpush1.bf16.msra.mxu0 %v658
    %1000 = vmatprep.subr.bf16.mxu0 %v663
    %1001 = vmatpush1.bf16.msra.mxu0 %v662
    %1002 = vmatprep.subr.bf16.mxu0 %v667
    %1003 = vmatpush1.bf16.msra.mxu0 %v666
    %1004 = vmatprep.subr.bf16.mxu0 %v671
    %1005 = vmatpush1.bf16.msra.mxu0 %v670
    %1006 = vmatprep.subr.bf16.mxu0 %v675
    %1007 = vmatpush1.bf16.msra.mxu0 %v674
    %1008 = vmatprep.subr.bf16.mxu0 %v679
    %1009 = vmatpush1.bf16.msra.mxu0 %v678
    %1010 = vmatprep.mubr.bf16.mxu0 %v217
    %1011 = vmatmul.mubr.bf16.gmra.mrb[0].mxu0 %v216
    %v1012 = vpop.f32.mrb[0].mxu0
    %v1013 = vadd.f32 0.0, %v1012
    %v1014 = vpop.f32.mrb[0].mxu0
    %v1015 = vadd.f32 0.0, %v1014
    %v1016 = vpop.f32.mrb[0].mxu0
    %v1017 = vadd.f32 0.0, %v1016
    %v1018 = vpop.f32.mrb[0].mxu0
    %v1019 = vadd.f32 0.0, %v1018
    %1020 = vmatprep.mubr.bf16.mxu0 %v221
    %1021 = vmatmul.mubr.bf16.gmra.mrb[0].mxu0 %v220
    %v1022 = vpop.f32.mrb[0].mxu0
    %v1023 = vadd.f32 0.0, %v1022
    %v1024 = vpop.f32.mrb[0].mxu0
    %v1025 = vadd.f32 0.0, %v1024
    %v1026 = vpop.f32.mrb[0].mxu0
    %v1027 = vadd.f32 0.0, %v1026
    %v1028 = vpop.f32.mrb[0].mxu0
    %v1029 = vadd.f32 0.0, %v1028
    %1030 = vdwg.mxu0
    %1031 = vmatprep.subr.bf16.mxu0 %v683
    %1032 = vmatpush1.bf16.msra.mxu0 %v682
    %1033 = vmatprep.subr.bf16.mxu0 %v687
    %1034 = vmatpush1.bf16.msra.mxu0 %v686
    %1035 = vmatprep.subr.bf16.mxu0 %v691
    %1036 = vmatpush1.bf16.msra.mxu0 %v690
    %1037 = vmatprep.subr.bf16.mxu0 %v695
    %1038 = vmatpush1.bf16.msra.mxu0 %v694
    %1039 = vmatprep.subr.bf16.mxu0 %v699
    %1040 = vmatpush1.bf16.msra.mxu0 %v698
    %1041 = vmatprep.subr.bf16.mxu0 %v703
    %1042 = vmatpush1.bf16.msra.mxu0 %v702
    %1043 = vmatprep.subr.bf16.mxu0 %v707
    %1044 = vmatpush1.bf16.msra.mxu0 %v706
    %1045 = vmatprep.subr.bf16.mxu0 %v711
    %1046 = vmatpush1.bf16.msra.mxu0 %v710
    %1047 = vmatprep.subr.bf16.mxu0 %v715
    %1048 = vmatpush1.bf16.msra.mxu0 %v714
    %1049 = vmatprep.subr.bf16.mxu0 %v719
    %1050 = vmatpush1.bf16.msra.mxu0 %v718
    %1051 = vmatprep.subr.bf16.mxu0 %v723
    %1052 = vmatpush1.bf16.msra.mxu0 %v722
    %1053 = vmatprep.subr.bf16.mxu0 %v727
    %1054 = vmatpush1.bf16.msra.mxu0 %v726
    %1055 = vmatprep.subr.bf16.mxu0 %v731
    %1056 = vmatpush1.bf16.msra.mxu0 %v730
    %1057 = vmatprep.subr.bf16.mxu0 %v735
    %1058 = vmatpush1.bf16.msra.mxu0 %v734
    %1059 = vmatprep.subr.bf16.mxu0 %v739
    %1060 = vmatpush1.bf16.msra.mxu0 %v738
    %1061 = vmatprep.subr.bf16.mxu0 %v743
    %1062 = vmatpush1.bf16.msra.mxu0 %v742
    %1063 = vmatprep.mubr.bf16.mxu0 %v219
    %1064 = vmatmul.mubr.bf16.gmra.mrb[0].mxu0 %v218
    %v1065 = vpop.f32.mrb[0].mxu0
    %v1066 = vadd.f32 %v1013, %v1065
    %v1067 = vpop.f32.mrb[0].mxu0
    %v1068 = vadd.f32 %v1015, %v1067
    %v1069 = vpop.f32.mrb[0].mxu0
    %v1070 = vadd.f32 %v1017, %v1069
    %v1071 = vpop.f32.mrb[0].mxu0
    %v1072 = vadd.f32 %v1019, %v1071
    %1073 = vmatprep.mubr.bf16.mxu0 %v223
    %1074 = vmatmul.mubr.bf16.gmra.mrb[0].mxu0 %v222
    %v1075 = vpop.f32.mrb[0].mxu0
    %v1076 = vadd.f32 %v1023, %v1075
    %v1077 = vpop.f32.mrb[0].mxu0
    %v1078 = vadd.f32 %v1025, %v1077
    %v1079 = vpop.f32.mrb[0].mxu0
    %v1080 = vadd.f32 %v1027, %v1079
    %v1081 = vpop.f32.mrb[0].mxu0
    %v1082 = vadd.f32 %v1029, %v1081
    %1083 = vdwg.mxu0
    %v1084 = vmul.f32 %v960, %v960
    %v1085 = vmul.f32 %v962, %v962
    %v1086 = vmul.f32 %v1066, %v1066
    %v1087 = vmul.f32 %v1068, %v1068
    %v1088 = vmul.f32 %v964, %v964
    %v1089 = vmul.f32 %v966, %v966
    %v1090 = vmul.f32 %v1070, %v1070
    %v1091 = vmul.f32 %v1072, %v1072
    %v1092 = vmul.f32 %v970, %v970
    %v1093 = vmul.f32 %v972, %v972
    %v1094 = vmul.f32 %v1076, %v1076
    %v1095 = vmul.f32 %v1078, %v1078
    %v1096 = vmul.f32 %v974, %v974
    %v1097 = vmul.f32 %v976, %v976
    %v1098 = vmul.f32 %v1080, %v1080
    %v1099 = vmul.f32 %v1082, %v1082
    %v1100 = vlaneseq
    %v1101 = vand.u32 %v1100, 127
    %v1102 = vadd.s32 %v1101, 128
    %vm1103 = vcmp.gt.s32.totalorder %v1101, 0
    %vm1104 = vcmp.gt.s32.totalorder %v1102, 0
    %v1105 = vsel %vm1103, %v1086, 0.0
    %v1106 = vsel %vm1104, %v1087, 0.0
    %v1107 = vsel %vm1103, %v1090, 0.0
    %v1108 = vsel %vm1104, %v1091, 0.0
    %v1109 = vsel %vm1103, %v1094, 0.0
    %v1110 = vsel %vm1104, %v1095, 0.0
    %v1111 = vsel %vm1103, %v1098, 0.0
    %v1112 = vsel %vm1104, %v1099, 0.0
    %v1113 = vadd.f32 %v1084, %v1105
    %v1114 = vadd.f32 %v1085, %v1106
    %v1115 = vadd.f32 %v1088, %v1107
    %v1116 = vadd.f32 %v1089, %v1108
    %v1117 = vadd.f32 %v1092, %v1109
    %v1118 = vadd.f32 %v1093, %v1110
    %v1119 = vadd.f32 %v1096, %v1111
    %v1120 = vadd.f32 %v1097, %v1112
    %v1121 = vld [vmem:[#allocation7] sm:$0xff]
    %v1122 = vld [vmem:[#allocation7 + $0x8] sm:$0xf]
    %v1123 = vld [vmem:[#allocation7 + $0xc] sm:$0xff]
    %v1124 = vld [vmem:[#allocation7 + $0x14] sm:$0xf]
    %v1125 = vld [vmem:[#allocation7 + $0x18] sm:$0xff]
    %v1126 = vld [vmem:[#allocation7 + $0x20] sm:$0xf]
    %v1127 = vld [vmem:[#allocation7 + $0x24] sm:$0xff]
    %v1128 = vld [vmem:[#allocation7 + $0x2c] sm:$0xf]
    %v1129 = vunpack.c.l.bf16 %v1121
    %v1130 = vunpack.c.h.bf16 %v1121
    %v1131 = vunpack.c.l.bf16 %v1122
    %v1132 = vunpack.c.l.bf16 %v1123
    %v1133 = vunpack.c.h.bf16 %v1123
    %v1134 = vunpack.c.l.bf16 %v1124
    %v1135 = vunpack.c.l.bf16 %v1125
    %v1136 = vunpack.c.h.bf16 %v1125
    %v1137 = vunpack.c.l.bf16 %v1126
    %v1138 = vunpack.c.l.bf16 %v1127
    %v1139 = vunpack.c.h.bf16 %v1127
    %v1140 = vunpack.c.l.bf16 %v1128
    %v1141 = vsub.f32 %v1113, %v1129
    %v1142 = vsub.f32 %v1114, %v1130
    %v1143 = vsub.f32 %v1115, %v1132
    %v1144 = vsub.f32 %v1116, %v1133
    %v1145 = vsub.f32 %v1117, %v1135
    %v1146 = vsub.f32 %v1118, %v1136
    %v1147 = vsub.f32 %v1119, %v1138
    %v1148 = vsub.f32 %v1120, %v1139
    %v1149 = vmax.f32 %v1141, 0.0
    %v1150 = vmax.f32 %v1142, 0.0
    %v1151 = vmax.f32 %v1143, 0.0
    %v1152 = vmax.f32 %v1144, 0.0
    %v1153 = vmax.f32 %v1145, 0.0
    %v1154 = vmax.f32 %v1146, 0.0
    %v1155 = vmax.f32 %v1147, 0.0
    %v1156 = vmax.f32 %v1148, 0.0
    %v1157 = vsub.f32 %v1086, %v1131
    %v1158 = vsub.f32 %v1090, %v1134
    %v1159 = vsub.f32 %v1094, %v1137
    %v1160 = vsub.f32 %v1098, %v1140
    %v1161 = vmax.f32 %v1157, 0.0
    %v1162 = vmax.f32 %v1158, 0.0
    %v1163 = vmax.f32 %v1159, 0.0
    %v1164 = vmax.f32 %v1160, 0.0
    %v1165 = vadd.f32 %v1149, %v1150
    %1166 = vadd.xlane.f32.xlu0 %v1165
    %v1167 = vpop.xlane.xlu0 %1166
    %v1168 = vadd.f32 %v1151, %v1152
    %1169 = vadd.xlane.f32.xlu0 %v1168
    %v1170 = vpop.xlane.xlu0 %1169
    %v1171 = vadd.f32 %v1153, %v1154
    %1172 = vadd.xlane.f32.xlu0 %v1171
    %v1173 = vpop.xlane.xlu0 %1172
    %v1174 = vadd.f32 %v1155, %v1156
    %1175 = vadd.xlane.f32.xlu0 %v1174
    %v1176 = vpop.xlane.xlu0 %1175
    %1177 = vadd.xlane.f32.xlu0 %v1161
    %v1178 = vpop.xlane.xlu0 %1177
    %1179 = vadd.xlane.f32.xlu0 %v1162
    %v1180 = vpop.xlane.xlu0 %1179
    %1181 = vadd.xlane.f32.xlu0 %v1163
    %v1182 = vpop.xlane.xlu0 %1181
    %1183 = vadd.xlane.f32.xlu0 %v1164
    %v1184 = vpop.xlane.xlu0 %1183
    %v1185 = vadd.f32 %v1167, %v1178
    %v1186 = vadd.f32 %v1170, %v1180
    %v1187 = vadd.f32 %v1173, %v1182
    %v1188 = vadd.f32 %v1176, %v1184
    %1189 = vst [vmem:[#allocation8] sm:$0xff] %v1185
    %1190 = vst [vmem:[#allocation8 + $0x8] sm:$0xff] %v1186
    %1191 = vst [vmem:[#allocation8 + $0x10] sm:$0xff] %v1187
    %1192 = vst [vmem:[#allocation8 + $0x18] sm:$0xff] %v1188
    // Predicated region
    $region26: #{tpu_custom_call.1} parent=1 // pred_check
      _
    $region27: #{tpu_custom_call.1} parent=1 // pred_check_branch
      %1194 = sbr.rel (0) target = $region29
    $region28: #{tpu_custom_call.1} parent=1 // pred_region
      %s1196 = ssub.s32 512, 512
      %1197 = vsyncadd [#allocation4], %s1196
      %s1198 = sshll.u32 [#allocation8], 4
      %s1199 = int_to_ptr.vmem [resolvable:$true] %s1198
      %1204 = dma.vmem_to_hbm [thread:$0]  %s1199, 512, %s3, [#allocation4], 128, 128, 8
    $region29: #{tpu_custom_call.1} parent=1 // pred_fallthru
      _
    // Predicated region
    $region30: #{tpu_custom_call.1} parent=1 // pred_check
      _
    $region31: #{tpu_custom_call.1} parent=1 // pred_check_branch
      %1206 = sbr.rel (0) target = $region33
    $region32: #{tpu_custom_call.1} parent=1 // pred_region
      %1207 = dma.done [#allocation4], 512
    $region33: #{tpu_custom_call.1} parent=1 // pred_fallthru
      _
    %1208 = vsyncpa [#allocation3], 1
    %1209 = vsyncpa [#allocation6], 1
    %1210 = vsyncpa [#allocation4], 1

</llo_original>
